<compile_context>
chip_gen: v6e
topology: v6e:2x2x1
jax: 0.10.0
libtpu: 0.0.40
codegen_flags: <defaults>
</compile_context>

<pallas_src>
import functools

import jax
import jax.numpy as jnp
from jax.experimental import pallas as pl
from jax.experimental.pallas import tpu as pltpu


def _round_up(n, m):
    return ((n + m - 1) // m) * m


_VMEM_BUDGET = 40 * 1024 * 1024      # v7x-safe working-set budget (64 MiB phys)


def _vmem_bytes(B, pt, K, FDP, NHP):
    """Rough per-call VMEM footprint (double-buffered blocks + f32 temp)."""
    patch_blk = B * pt * K * 2            # bf16 patches block
    convw = K * FDP * 2                   # bf16 stacked conv weights
    convb = FDP * 4
    headw = FDP * NHP * 2                 # bf16 fused head weights
    headb = NHP * 4
    feats_out = B * FDP * 4
    heads_out = B * NHP * 4
    conv_tmp = B * pt * FDP * 4           # f32 conv matmul temporary
    dbl = 2 * (patch_blk + convw + convb + headw + headb + feats_out + heads_out)
    return dbl + conv_tmp


# ---------------------------------------------------------------------------
# Fused kernel: conv3x3 (im2col matmul, all convnets stacked in N) + ReLU +
# GAP running sum, then a single fused fc/fe_fc/(oldfc) head matmul.
# Grid: (spatial tile p,) — a reduction ("arbitrary").
# ---------------------------------------------------------------------------
def _foster_kernel(patch_ref, convw_ref, convb_ref, headw_ref, headb_ref,
                   feats_ref, heads_ref, *, inv_p, p_valid, needs_mask):
    p = pl.program_id(0)
    n_p = pl.num_programs(0)

    @pl.when(p == 0)
    def _():
        feats_ref[...] = jnp.zeros_like(feats_ref)

    B, Pt, K = patch_ref.shape
    FDP = convw_ref.shape[-1]

    # conv3x3 as one 2-D im2col matmul, batch folded into M, all convnets in N.
    patches = patch_ref[...].reshape(B * Pt, K)                 # (B*Pt, K) bf16
    conv = jnp.dot(patches, convw_ref[...],
                   preferred_element_type=jnp.float32)          # (B*Pt, FDP) f32
    conv = jnp.maximum(conv + convb_ref[...], 0.0)              # bias + ReLU
    conv = conv.reshape(B, Pt, FDP)
    if needs_mask:
        # Padded spatial rows are NOT zero after bias+ReLU; mask before the GAP.
        row = jax.lax.broadcasted_iota(jnp.int32, (1, Pt, 1), 1)
        conv = jnp.where(p * Pt + row < p_valid, conv, 0.0)
    feats_ref[...] += conv.sum(axis=1)                          # GAP partial sum

    @pl.when(p == n_p - 1)
    def _finalize():
        feat = feats_ref[...] * inv_p                           # GAP (1/P once)
        feats_ref[...] = feat                                   # (B, FDP) f32
        # One fused matmul for fc | fe_fc | (oldfc): lane-dense, N >= 256.
        heads_ref[...] = (
            jnp.dot(feat.astype(jnp.bfloat16), headw_ref[...],
                    preferred_element_type=jnp.float32)
            + headb_ref[...])


def _foster_pallas_call(patches, conv_w, conv_b, head_w, head_b,
                        p_valid, pt, vmem_limit):
    B, P_pad, K = patches.shape
    FDP = conv_w.shape[-1]
    NHP = head_w.shape[-1]
    grid = (P_pad // pt,)

    kernel = functools.partial(
        _foster_kernel, inv_p=1.0 / p_valid, p_valid=p_valid,
        needs_mask=(P_pad != p_valid))

    return pl.pallas_call(
        kernel,
        grid_spec=pltpu.PrefetchScalarGridSpec(
            num_scalar_prefetch=0,
            grid=grid,
            in_specs=[
                pl.BlockSpec((B, pt, K), lambda p: (0, p, 0)),   # patches tile
                pl.BlockSpec((K, FDP), lambda p: (0, 0)),        # stacked conv_w
                pl.BlockSpec((1, FDP), lambda p: (0, 0)),        # stacked conv_b
                pl.BlockSpec((FDP, NHP), lambda p: (0, 0)),      # fused heads W
                pl.BlockSpec((1, NHP), lambda p: (0, 0)),        # fused heads b
            ],
            out_specs=[
                pl.BlockSpec((B, FDP), lambda p: (0, 0)),        # features
                pl.BlockSpec((B, NHP), lambda p: (0, 0)),        # head logits
            ],
        ),
        out_shape=(
            jax.ShapeDtypeStruct((B, FDP), jnp.float32),
            jax.ShapeDtypeStruct((B, NHP), jnp.float32),
        ),
        compiler_params=pltpu.CompilerParams(
            # Single spatial reduction axis (GAP accumulates across it).
            # TODO(synk): for v7x megacore with large batches, add a leading
            # "parallel" batch-tile axis (needs B >= 16 so each core keeps a
            # full sublane group); scratch-free design makes that safe.
            dimension_semantics=("arbitrary",),
            vmem_limit_bytes=vmem_limit),
    )(patches, conv_w, conv_b, head_w, head_b)


# ---------------------------------------------------------------------------
# Plain-JAX glue: im2col (lane-friendly K order), padding, forward wrapper.
# ---------------------------------------------------------------------------
def im2col(x, kh=3, kw=3):
    """x: (B, C, H, W) NCHW, stride=1, pad=1 -> (B, H*W, kh*kw*C)."""
    B, C, H, W = x.shape
    xn = jnp.transpose(x, (0, 2, 3, 1))                    # NHWC (small)
    xp = jnp.pad(xn, ((0, 0), (1, 1), (1, 1), (0, 0)))
    shifts = [xp[:, dh:dh + H, dw:dw + W, :]
              for dh in range(kh) for dw in range(kw)]     # each (B, H, W, C)
    p = jnp.stack(shifts, axis=3)                          # (B, H, W, kh*kw, C)
    return p.reshape(B, H * W, kh * kw * C)


@functools.partial(jax.jit, static_argnames=("tile_p",))
def foster_net_forward(x, params, tile_p=512):
    conv_w = params["conv_w"]                              # (n_conv, K, F)
    n_conv, K, F = conv_w.shape
    FD = n_conv * F                                        # feature_dim
    FDP = _round_up(FD, 128)

    patches = im2col(x).astype(jnp.bfloat16)               # (B, P, K) bf16
    B, P, _ = patches.shape

    fc_w, fc_b = params["fc_w"], params["fc_b"]            # (FD, NC), (1, NC)
    fe_w, fe_b = params["fe_fc_w"], params["fe_fc_b"]      # (F, NC), (1, NC)
    old_w, old_b = params.get("oldfc_w"), params.get("oldfc_b")
    has_old = old_w is not None
    NC = fc_w.shape[1]
    NC_old = old_w.shape[1] if has_old else 0
    NCP = _round_up(max(NC, NC_old, 1), 128)
    n_heads = 3 if has_old else 2                          # static specialization
    NHP = n_heads * NCP

    # ---- tile choice (multiple of 8), VMEM budget, padded-P masking --------
    pt = _round_up(min(tile_p, _round_up(P, 8)), 8)
    while pt > 8 and _vmem_bytes(B, pt, K, FDP, NHP) > _VMEM_BUDGET:
        pt = max(8, _round_up(pt // 2, 8))
    P_pad = _round_up(P, pt)
    if P_pad > P:
        patches = jnp.pad(patches, ((0, 0), (0, P_pad - P), (0, 0)))
    vmem_limit = int(min(max(int(1.5 * _vmem_bytes(B, pt, K, FDP, NHP)),
                             32 * 1024 * 1024), 64 * 1024 * 1024))

    # ---- stacked conv weights: one (K, FDP) RHS in torch.cat feature order --
    conv_w_s = jnp.transpose(conv_w, (1, 0, 2)).reshape(K, FD)
    conv_w_s = jnp.pad(conv_w_s, ((0, 0), (0, FDP - FD))).astype(jnp.bfloat16)
    conv_b_s = jnp.pad(params["conv_b"].reshape(1, FD),
                       ((0, 0), (0, FDP - FD))).astype(jnp.float32)

    # ---- fused heads: fc | fe_fc | (oldfc) embedded into (FDP, NHP) --------
    def embed(w, row_off):
        full = jnp.zeros((FDP, NCP), jnp.float32)
        return full.at[row_off:row_off + w.shape[0], :w.shape[1]].set(w)

    def pad_cols(b):
        return jnp.pad(b, ((0, 0), (0, NCP - b.shape[1]))).astype(jnp.float32)

    head_ws = [embed(fc_w, 0), embed(fe_w, FD - F)]        # fe_fc sees last F
    head_bs = [pad_cols(fc_b), pad_cols(fe_b)]
    if has_old:
        head_ws.append(embed(old_w, 0))                    # oldfc sees first FD-F
        head_bs.append(pad_cols(old_b))
    head_w = jnp.concatenate(head_ws, axis=1).astype(jnp.bfloat16)  # (FDP, NHP)
    head_b = jnp.concatenate(head_bs, axis=1)                        # (1, NHP)

    feats_p, heads_p = _foster_pallas_call(
        patches, conv_w_s, conv_b_s, head_w, head_b, P, pt, vmem_limit)

    features = feats_p[:, :FD]                             # torch.cat order
    logits = heads_p[:, :NC]
    out = {"logits": logits,
           "fe_logits": heads_p[:, NCP:NCP + NC],
           "features": features,
           "eval_logits": logits}
    if has_old:
        out["old_logits"] = heads_p[:, 2 * NCP:2 * NCP + NC_old]
    return out


# ---------------------------------------------------------------------------
# Pure-JAX reference (same bf16-operand / f32-accumulate contract).
# ---------------------------------------------------------------------------
def reference_forward(x, params):
    conv_w = params["conv_w"]
    n_conv, K, F = conv_w.shape
    patches = im2col(x).astype(jnp.bfloat16)
    B, P, _ = patches.shape
    feats = []
    for i in range(n_conv):
        conv = jnp.dot(patches.reshape(B * P, K),
                       conv_w[i].astype(jnp.bfloat16),
                       preferred_element_type=jnp.float32)
        conv = jnp.maximum(conv + params["conv_b"][i], 0.0)
        feats.append(conv.reshape(B, P, F).mean(axis=1))
    features = jnp.concatenate(feats, axis=1)

    def head(f, w, b):
        return jnp.dot(f.astype(jnp.bfloat16), w.astype(jnp.bfloat16),
                       preferred_element_type=jnp.float32) + b

    logits = head(features, params["fc_w"], params["fc_b"])
    out = {"logits": logits,
           "fe_logits": head(features[:, -F:], params["fe_fc_w"],
                             params["fe_fc_b"]),
           "features": features,
           "eval_logits": logits}
    if params.get("oldfc_w") is not None:
        out["old_logits"] = head(features[:, :-F], params["oldfc_w"],
                                 params["oldfc_b"])
    return out


if __name__ == "__main__":
    key = jax.random.PRNGKey(0)
    B, C, H, W = 2, 3, 16, 16          # small NCHW input (CIFAR-like RGB)
    F = 64                             # resnet32 out_dim (per-convnet)
    task_sizes = [6, 4]                # two update_fc() calls -> two convnets
    n_conv = len(task_sizes)
    NC = sum(task_sizes)               # current fc out_features
    NC_old = sum(task_sizes[:-1])      # oldfc out_features (previous fc)
    K = C * 3 * 3
    FD = n_conv * F                    # feature_dim

    keys = jax.random.split(key, 9)
    x = jax.random.normal(keys[0], (B, C, H, W), jnp.float32)

    params = {
        "conv_w": jax.random.normal(keys[1], (n_conv, K, F), jnp.float32) * 0.1,
        "conv_b": jax.random.normal(keys[2], (n_conv, 1, F), jnp.float32) * 0.1,
        "fc_w": jax.random.normal(keys[3], (FD, NC), jnp.float32) * 0.1,
        "fc_b": jax.random.normal(keys[4], (1, NC), jnp.float32) * 0.01,
        "fe_fc_w": jax.random.normal(keys[5], (F, NC), jnp.float32) * 0.1,
        "fe_fc_b": jax.random.normal(keys[6], (1, NC), jnp.float32) * 0.01,
        "oldfc_w": jax.random.normal(keys[7], (FD - F, NC_old),
                                     jnp.float32) * 0.1,
        "oldfc_b": jax.random.normal(keys[8], (1, NC_old), jnp.float32) * 0.01,
    }

    ref = reference_forward(x, params)

    def check(out, ref_out, names):
        for name in names:
            assert out[name].shape == ref_out[name].shape, (
                name, out[name].shape, ref_out[name].shape)
            assert jnp.allclose(out[name], ref_out[name],
                                atol=2e-3, rtol=2e-3), name

    all_names = ("logits", "fe_logits", "old_logits", "features", "eval_logits")

    # Default path (single large spatial tile for a 16x16 input).
    out = foster_net_forward(x, params)
    jax.block_until_ready(out)
    check(out, ref, all_names)
    assert out["logits"].shape == (B, NC)
    assert out["fe_logits"].shape == (B, NC)
    assert out["old_logits"].shape == (B, NC_old)
    assert out["features"].shape == (B, FD)

    # Multi-tile path with P padded to a tile multiple (exercises row masking).
    out_m = foster_net_forward(x, params, tile_p=96)
    jax.block_until_ready(out_m)
    check(out_m, ref, all_names)

    # First-task case: single convnet, no oldfc (statically specialized call).
    kk = jax.random.split(keys[8], 4)
    NC1 = task_sizes[0]
    params1 = {
        "conv_w": params["conv_w"][:1],
        "conv_b": params["conv_b"][:1],
        "fc_w": jax.random.normal(kk[0], (F, NC1), jnp.float32) * 0.1,
        "fc_b": jax.random.normal(kk[1], (1, NC1), jnp.float32) * 0.01,
        "fe_fc_w": jax.random.normal(kk[2], (F, NC1), jnp.float32) * 0.1,
        "fe_fc_b": jax.random.normal(kk[3], (1, NC1), jnp.float32) * 0.01,
    }
    out1 = foster_net_forward(x, params1)
    jax.block_until_ready(out1)
    ref1 = reference_forward(x, params1)
    check(out1, ref1, ("logits", "fe_logits", "features", "eval_logits"))
    assert "old_logits" not in out1
    assert out1["features"].shape == (B, F)

    print("KERNEL_OK")
</pallas_src>

<mosaic_0001>
module attributes {stable_mosaic.version = 11 : i64} {
  func.func @_foster_kernel(%arg0: i32, %arg1: memref<2x256x27xbf16, #tpu.memory_space<vmem>>, %arg2: memref<27x128xbf16, #tpu.memory_space<vmem>>, %arg3: memref<1x128xf32, #tpu.memory_space<vmem>>, %arg4: memref<128x384xbf16, #tpu.memory_space<vmem>>, %arg5: memref<1x384xf32, #tpu.memory_space<vmem>>, %arg6: memref<2x128xf32, #tpu.memory_space<vmem>>, %arg7: memref<2x384xf32, #tpu.memory_space<vmem>>) attributes {dimension_semantics = [#tpu.dimension_semantics<arbitrary>], iteration_bounds = array<i64: 1>, scalar_prefetch = 0 : i64, scratch_operands = 0 : i64, tpu.core_type = #tpu.core_type<tc>, window_params = [{transform_indices = @transform_0, window_bounds = array<i64: 2, 256, 27>}, {pipeline_mode = #tpu.pipeline_mode<synchronous>, transform_indices = @transform_1, window_bounds = array<i64: 27, 128>}, {pipeline_mode = #tpu.pipeline_mode<synchronous>, transform_indices = @transform_2, window_bounds = array<i64: 1, 128>}, {pipeline_mode = #tpu.pipeline_mode<synchronous>, transform_indices = @transform_3, window_bounds = array<i64: 128, 384>}, {pipeline_mode = #tpu.pipeline_mode<synchronous>, transform_indices = @transform_4, window_bounds = array<i64: 1, 384>}, {pipeline_mode = #tpu.pipeline_mode<synchronous>, transform_indices = @transform_5, window_bounds = array<i64: 2, 128>}, {pipeline_mode = #tpu.pipeline_mode<synchronous>, transform_indices = @transform_6, window_bounds = array<i64: 2, 384>}]} {
    %c0_i32 = arith.constant 0 : i32
    %0 = arith.cmpi eq, %arg0, %c0_i32 : i32
    %1 = arith.extui %0 : i1 to i32
    %c0_i32_0 = arith.constant 0 : i32
    %2 = arith.cmpi ne, %1, %c0_i32_0 : i32
    scf.if %2 {
      %cst_15 = arith.constant 0.000000e+00 : f32
      %20 = vector.broadcast %cst_15 : f32 to vector<2x128xf32>
      %c0_16 = arith.constant 0 : index
      %c0_17 = arith.constant 0 : index
      %21 = vector.load %arg6[%c0_16, %c0_17] : memref<2x128xf32, #tpu.memory_space<vmem>>, vector<2x128xf32>
      tpu.vector_store %arg6[%c0_16, %c0_17], %20 {strides = array<i32>} : memref<2x128xf32, #tpu.memory_space<vmem>>, vector<2x128xf32>,
    } else {
    }
    %c0 = arith.constant 0 : index
    %c0_1 = arith.constant 0 : index
    %c0_2 = arith.constant 0 : index
    %3 = vector.load %arg1[%c0, %c0_1, %c0_2] : memref<2x256x27xbf16, #tpu.memory_space<vmem>>, vector<2x256x27xbf16>
    %4 = vector.shape_cast %3 : vector<2x256x27xbf16> to vector<512x27xbf16>
    %c0_3 = arith.constant 0 : index
    %c0_4 = arith.constant 0 : index
    %5 = vector.load %arg2[%c0_3, %c0_4] : memref<27x128xbf16, #tpu.memory_space<vmem>>, vector<27x128xbf16>
    %cst = arith.constant dense<0.000000e+00> : vector<512x128xf32>
    %6 = tpu.matmul %4, %5, %cst {dimension_numbers = #tpu.dot_dimension_numbers<[1], [0], [0], [1], [0, 0, 1, 1], [], []>} : vector<512x27xbf16>, vector<27x128xbf16>, vector<512x128xf32> -> vector<512x128xf32>
    %c0_5 = arith.constant 0 : index
    %c0_6 = arith.constant 0 : index
    %7 = vector.load %arg3[%c0_5, %c0_6] : memref<1x128xf32, #tpu.memory_space<vmem>>, vector<1x128xf32>
    %8 = vector.broadcast %7 : vector<1x128xf32> to vector<512x128xf32>
    %9 = arith.addf %6, %8 : vector<512x128xf32>
    %cst_7 = arith.constant 0.000000e+00 : f32
    %10 = vector.broadcast %cst_7 : f32 to vector<512x128xf32>
    %11 = arith.maximumf %9, %10 : vector<512x128xf32>
    %12 = vector.shape_cast %11 : vector<512x128xf32> to vector<2x256x128xf32>
    %c0_8 = arith.constant 0 : index
    %c0_9 = arith.constant 0 : index
    %13 = vector.load %arg6[%c0_8, %c0_9] : memref<2x128xf32, #tpu.memory_space<vmem>>, vector<2x128xf32>
    %cst_10 = arith.constant dense<0.000000e+00> : vector<2x128xf32>
    %14 = vector.multi_reduction <add>, %12, %cst_10 [1] : vector<2x256x128xf32> to vector<2x128xf32>
    %15 = arith.addf %13, %14 : vector<2x128xf32>
    %c0_11 = arith.constant 0 : index
    %c0_12 = arith.constant 0 : index
    %16 = vector.load %arg6[%c0_11, %c0_12] : memref<2x128xf32, #tpu.memory_space<vmem>>, vector<2x128xf32>
    tpu.vector_store %arg6[%c0_11, %c0_12], %15 {strides = array<i32>} : memref<2x128xf32, #tpu.memory_space<vmem>>, vector<2x128xf32>,
    %c0_i32_13 = arith.constant 0 : i32
    %17 = arith.cmpi eq, %arg0, %c0_i32_13 : i32
    %18 = arith.extui %17 : i1 to i32
    %c0_i32_14 = arith.constant 0 : i32
    %19 = arith.cmpi ne, %18, %c0_i32_14 : i32
    scf.if %19 {
      %c0_15 = arith.constant 0 : index
      %c0_16 = arith.constant 0 : index
      %20 = vector.load %arg6[%c0_15, %c0_16] : memref<2x128xf32, #tpu.memory_space<vmem>>, vector<2x128xf32>
      %cst_17 = arith.constant 3.906250e-03 : f32
      %21 = vector.broadcast %cst_17 : f32 to vector<2x128xf32>
      %22 = arith.mulf %20, %21 : vector<2x128xf32>
      %c0_18 = arith.constant 0 : index
      %c0_19 = arith.constant 0 : index
      %23 = vector.load %arg6[%c0_18, %c0_19] : memref<2x128xf32, #tpu.memory_space<vmem>>, vector<2x128xf32>
      tpu.vector_store %arg6[%c0_18, %c0_19], %22 {strides = array<i32>} : memref<2x128xf32, #tpu.memory_space<vmem>>, vector<2x128xf32>,
      %24 = arith.truncf %22 : vector<2x128xf32> to vector<2x128xbf16>
      %c0_20 = arith.constant 0 : index
      %c0_21 = arith.constant 0 : index
      %25 = vector.load %arg4[%c0_20, %c0_21] : memref<128x384xbf16, #tpu.memory_space<vmem>>, vector<128x384xbf16>
      %cst_22 = arith.constant dense<0.000000e+00> : vector<2x384xf32>
      %26 = tpu.matmul %24, %25, %cst_22 {dimension_numbers = #tpu.dot_dimension_numbers<[1], [0], [0], [1], [0, 0, 1, 1], [], []>} : vector<2x128xbf16>, vector<128x384xbf16>, vector<2x384xf32> -> vector<2x384xf32>
      %c0_23 = arith.constant 0 : index
      %c0_24 = arith.constant 0 : index
      %27 = vector.load %arg5[%c0_23, %c0_24] : memref<1x384xf32, #tpu.memory_space<vmem>>, vector<1x384xf32>
      %28 = vector.broadcast %27 : vector<1x384xf32> to vector<2x384xf32>
      %29 = arith.addf %26, %28 : vector<2x384xf32>
      %c0_25 = arith.constant 0 : index
      %c0_26 = arith.constant 0 : index
      %30 = vector.load %arg7[%c0_25, %c0_26] : memref<2x384xf32, #tpu.memory_space<vmem>>, vector<2x384xf32>
      tpu.vector_store %arg7[%c0_25, %c0_26], %29 {strides = array<i32>} : memref<2x384xf32, #tpu.memory_space<vmem>>, vector<2x384xf32>,
    } else {
    }
    return
  }
  func.func @transform_0(%arg0: i32) -> (i32, i32, i32) {
    %c0_i32 = arith.constant 0 : i32
    %c0_i32_0 = arith.constant 0 : i32
    %c0_i32_1 = arith.constant 0 : i32
    return %c0_i32, %arg0, %c0_i32_0 : i32, i32, i32
  }
  func.func @transform_1(%arg0: i32) -> (i32, i32) {
    %c0_i32 = arith.constant 0 : i32
    %c0_i32_0 = arith.constant 0 : i32
    %c0_i32_1 = arith.constant 0 : i32
    return %c0_i32, %c0_i32_0 : i32, i32
  }
  func.func @transform_2(%arg0: i32) -> (i32, i32) {
    %c0_i32 = arith.constant 0 : i32
    %c0_i32_0 = arith.constant 0 : i32
    %c0_i32_1 = arith.constant 0 : i32
    return %c0_i32, %c0_i32_0 : i32, i32
  }
  func.func @transform_3(%arg0: i32) -> (i32, i32) {
    %c0_i32 = arith.constant 0 : i32
    %c0_i32_0 = arith.constant 0 : i32
    %c0_i32_1 = arith.constant 0 : i32
    return %c0_i32, %c0_i32_0 : i32, i32
  }
  func.func @transform_4(%arg0: i32) -> (i32, i32) {
    %c0_i32 = arith.constant 0 : i32
    %c0_i32_0 = arith.constant 0 : i32
    %c0_i32_1 = arith.constant 0 : i32
    return %c0_i32, %c0_i32_0 : i32, i32
  }
  func.func @transform_5(%arg0: i32) -> (i32, i32) {
    %c0_i32 = arith.constant 0 : i32
    %c0_i32_0 = arith.constant 0 : i32
    %c0_i32_1 = arith.constant 0 : i32
    return %c0_i32, %c0_i32_0 : i32, i32
  }
  func.func @transform_6(%arg0: i32) -> (i32, i32) {
    %c0_i32 = arith.constant 0 : i32
    %c0_i32_0 = arith.constant 0 : i32
    %c0_i32_1 = arith.constant 0 : i32
    return %c0_i32, %c0_i32_0 : i32, i32
  }
}

</mosaic_0001>

<llo_original>
// kernel: foster_net_forward.1
$region0: #{foster_net_forward.1}
  #allocation0 [shape = 'u32[]', space=smem, size = 0x4, offset = 0x4, fixed_abs, tag = 'smem constant byte address 0x4 - core index']
  #allocation1 [shape = 'u32[144,128]{1,0:T(1,128)}', space=vmem, size = 0x12000, scoped, tag = 'internal scratch']
  %s0 = inlined_call_operand.vmem [shape: bf16[2,256,27], index: 0, kind: input, shape index: {}]
  %s1 = inlined_call_operand.vmem [shape: bf16[27,128], index: 1, kind: input, shape index: {}]
  %s2 = inlined_call_operand.vmem [shape: f32[1,128], index: 2, kind: input, shape index: {}]
  %s3 = inlined_call_operand.vmem [shape: bf16[128,384], index: 3, kind: input, shape index: {}]
  %s4 = inlined_call_operand.vmem [shape: f32[1,384], index: 4, kind: input, shape index: {}]
  %s5 = inlined_call_operand.hbm [shape: f32[2,128], index: 5, kind: output, shape index: {0}]
  %s6 = inlined_call_operand.vmem [shape: f32[2,384], index: 6, kind: output, shape index: {1}]
  %7 = xla_tuple %s5, %s6
  %s8 = sld [smem:[#allocation0]]
  $region46: #{foster_net_forward.1} parent=0
    _
  %s10 = ssub.s32 1, %s8
  %s11 = scalar_select 0, %s10, %s8
  $region1: #{foster_net_forward.1} parent=0
    #allocation2 [shape = 'u8[1024]{0}', space=vmem, size = 0x400, scoped, tag = 'output window, operand 0, single buffered']
    #allocation3 [shape = 's32[1]{0}', space=sflag, size = 0x4, scoped, tag = 'scoped memory for foster_net_forward.1']
    %12 = vsyncpa [#allocation3], 0
    // Predicated region
    $region2: #{foster_net_forward.1} parent=1 // pred_check
      _
    $region3: #{foster_net_forward.1} parent=1 // pred_check_branch
      %14 = sbr.rel (0) target = $region5
    $region4: #{foster_net_forward.1} parent=1 // pred_region
      _
    $region5: #{foster_net_forward.1} parent=1 // pred_fallthru
      _
    // Predicated region
    $region6: #{foster_net_forward.1} parent=1 // pred_check
      _
    $region7: #{foster_net_forward.1} parent=1 // pred_check_branch
      %16 = sbr.rel (0) target = $region9
    $region8: #{foster_net_forward.1} parent=1 // pred_region
      _
    $region9: #{foster_net_forward.1} parent=1 // pred_fallthru
      _
    // Predicated region
    $region10: #{foster_net_forward.1} parent=1 // pred_check
      _
    $region11: #{foster_net_forward.1} parent=1 // pred_check_branch
      %18 = sbr.rel (0) target = $region13
    $region12: #{foster_net_forward.1} parent=1 // pred_region
      _
    $region13: #{foster_net_forward.1} parent=1 // pred_fallthru
      _
    // Predicated region
    $region14: #{foster_net_forward.1} parent=1 // pred_check
      _
    $region15: #{foster_net_forward.1} parent=1 // pred_check_branch
      %20 = sbr.rel (0) target = $region17
    $region16: #{foster_net_forward.1} parent=1 // pred_region
      _
    $region17: #{foster_net_forward.1} parent=1 // pred_fallthru
      _
    // Predicated region
    $region18: #{foster_net_forward.1} parent=1 // pred_check
      _
    $region19: #{foster_net_forward.1} parent=1 // pred_check_branch
      %22 = sbr.rel (0) target = $region21
    $region20: #{foster_net_forward.1} parent=1 // pred_region
      _
    $region21: #{foster_net_forward.1} parent=1 // pred_fallthru
      _
    %p24 = scmp.eq.s32.totalorder 0, 0
    // Predicated region
    $region22: #{foster_net_forward.1} parent=1 // pred_check
      %p25 = pneg %p24
    $region23: #{foster_net_forward.1} parent=1 // pred_check_branch
      %27 = sbr.rel (%p25) target = $region25
    $region24: #{foster_net_forward.1} parent=1 // pred_region
      %28 = vst [vmem:[#allocation2] sm:$0x3] 0.0
    $region25: #{foster_net_forward.1} parent=1 // pred_fallthru
      _
    %v29 = vld [vmem:[%s0] sm:$0xf]
    %v30 = vld [vmem:[%s0 + $0x4] sm:$0xf]
    %v31 = vld [vmem:[%s0 + $0x8] sm:$0xf]
    %v32 = vld [vmem:[%s0 + $0xc] sm:$0xf]
    %v33 = vld [vmem:[%s0 + $0x10] sm:$0xf]
    %v34 = vld [vmem:[%s0 + $0x14] sm:$0xf]
    %v35 = vld [vmem:[%s0 + $0x18] sm:$0xf]
    %v36 = vld [vmem:[%s0 + $0x1c] sm:$0xf]
    %v37 = vld [vmem:[%s0 + $0x20] sm:$0xf]
    %v38 = vld [vmem:[%s0 + $0x24] sm:$0xf]
    %v39 = vld [vmem:[%s0 + $0x28] sm:$0xf]
    %v40 = vld [vmem:[%s0 + $0x2c] sm:$0xf]
    %v41 = vld [vmem:[%s0 + $0x30] sm:$0xf]
    %v42 = vld [vmem:[%s0 + $0x34] sm:$0xf]
    %v43 = vld [vmem:[%s0 + $0x38] sm:$0xf]
    %v44 = vld [vmem:[%s0 + $0x3c] sm:$0xf]
    %v45 = vld [vmem:[%s0 + $0x40] sm:$0xf]
    %v46 = vld [vmem:[%s0 + $0x44] sm:$0xf]
    %v47 = vld [vmem:[%s0 + $0x48] sm:$0xf]
    %v48 = vld [vmem:[%s0 + $0x4c] sm:$0xf]
    %v49 = vld [vmem:[%s0 + $0x50] sm:$0xf]
    %v50 = vld [vmem:[%s0 + $0x54] sm:$0xf]
    %v51 = vld [vmem:[%s0 + $0x58] sm:$0xf]
    %v52 = vld [vmem:[%s0 + $0x5c] sm:$0xf]
    %v53 = vld [vmem:[%s0 + $0x60] sm:$0xf]
    %v54 = vld [vmem:[%s0 + $0x64] sm:$0xf]
    %v55 = vld [vmem:[%s0 + $0x68] sm:$0xf]
    %v56 = vld [vmem:[%s0 + $0x6c] sm:$0xf]
    %v57 = vld [vmem:[%s0 + $0x70] sm:$0xf]
    %v58 = vld [vmem:[%s0 + $0x74] sm:$0xf]
    %v59 = vld [vmem:[%s0 + $0x78] sm:$0xf]
    %v60 = vld [vmem:[%s0 + $0x7c] sm:$0xf]
    %v61 = vld [vmem:[%s0 + $0x80] sm:$0xf]
    %v62 = vld [vmem:[%s0 + $0x84] sm:$0xf]
    %v63 = vld [vmem:[%s0 + $0x88] sm:$0xf]
    %v64 = vld [vmem:[%s0 + $0x8c] sm:$0xf]
    %v65 = vld [vmem:[%s0 + $0x90] sm:$0xf]
    %v66 = vld [vmem:[%s0 + $0x94] sm:$0xf]
    %v67 = vld [vmem:[%s0 + $0x98] sm:$0xf]
    %v68 = vld [vmem:[%s0 + $0x9c] sm:$0xf]
    %v69 = vld [vmem:[%s0 + $0xa0] sm:$0xf]
    %v70 = vld [vmem:[%s0 + $0xa4] sm:$0xf]
    %v71 = vld [vmem:[%s0 + $0xa8] sm:$0xf]
    %v72 = vld [vmem:[%s0 + $0xac] sm:$0xf]
    %v73 = vld [vmem:[%s0 + $0xb0] sm:$0xf]
    %v74 = vld [vmem:[%s0 + $0xb4] sm:$0xf]
    %v75 = vld [vmem:[%s0 + $0xb8] sm:$0xf]
    %v76 = vld [vmem:[%s0 + $0xbc] sm:$0xf]
    %v77 = vld [vmem:[%s0 + $0xc0] sm:$0xf]
    %v78 = vld [vmem:[%s0 + $0xc4] sm:$0xf]
    %v79 = vld [vmem:[%s0 + $0xc8] sm:$0xf]
    %v80 = vld [vmem:[%s0 + $0xcc] sm:$0xf]
    %v81 = vld [vmem:[%s0 + $0xd0] sm:$0xf]
    %v82 = vld [vmem:[%s0 + $0xd4] sm:$0xf]
    %v83 = vld [vmem:[%s0 + $0xd8] sm:$0xf]
    %v84 = vld [vmem:[%s0 + $0xdc] sm:$0xf]
    %v85 = vld [vmem:[%s0 + $0xe0] sm:$0xf]
    %v86 = vld [vmem:[%s0 + $0xe4] sm:$0xf]
    %v87 = vld [vmem:[%s0 + $0xe8] sm:$0xf]
    %v88 = vld [vmem:[%s0 + $0xec] sm:$0xf]
    %v89 = vld [vmem:[%s0 + $0xf0] sm:$0xf]
    %v90 = vld [vmem:[%s0 + $0xf4] sm:$0xf]
    %v91 = vld [vmem:[%s0 + $0xf8] sm:$0xf]
    %v92 = vld [vmem:[%s0 + $0xfc] sm:$0xf]
    %v93 = vld [vmem:[%s1] sm:$0xf]
    %v94 = vld [vmem:[%s1 + $0x4] sm:$0xf]
    %v95 = vld [vmem:[%s1 + $0x8] sm:$0xf]
    %v96 = vld [vmem:[%s1 + $0xc] sm:$0x3]
    %v97 = vld [vmem:[%s2] sm:$0x1]
    %v99 = vlaneseq
    %v100 = vshrl.u32 %v99, 7
    %v101 = vsub.s32 0, %v100
    %v102 = vrot.slane %v97, %v101
    %v168 = vunpack.c.l.b16 %v29
    %v169 = vunpack.c.l.b16 %v30
    %v170 = vunpack.c.l.b16 %v31
    %v171 = vunpack.c.l.b16 %v32
    %v172 = vunpack.c.l.b16 %v33
    %v173 = vunpack.c.l.b16 %v34
    %v174 = vunpack.c.l.b16 %v35
    %v175 = vunpack.c.l.b16 %v36
    %v176 = vunpack.c.l.b16 %v37
    %v177 = vunpack.c.l.b16 %v38
    %v178 = vunpack.c.l.b16 %v39
    %v179 = vunpack.c.l.b16 %v40
    %v180 = vunpack.c.l.b16 %v41
    %v181 = vunpack.c.l.b16 %v42
    %v182 = vunpack.c.l.b16 %v43
    %v183 = vunpack.c.l.b16 %v44
    %v184 = vunpack.c.l.b16 %v45
    %v185 = vunpack.c.l.b16 %v46
    %v186 = vunpack.c.l.b16 %v47
    %v187 = vunpack.c.l.b16 %v48
    %v188 = vunpack.c.l.b16 %v49
    %v189 = vunpack.c.l.b16 %v50
    %v190 = vunpack.c.l.b16 %v51
    %v191 = vunpack.c.l.b16 %v52
    %v192 = vunpack.c.l.b16 %v53
    %v193 = vunpack.c.l.b16 %v54
    %v194 = vunpack.c.l.b16 %v55
    %v195 = vunpack.c.l.b16 %v56
    %v196 = vunpack.c.l.b16 %v57
    %v197 = vunpack.c.l.b16 %v58
    %v198 = vunpack.c.l.b16 %v59
    %v199 = vunpack.c.l.b16 %v60
    %v200 = vunpack.c.l.b16 %v61
    %v201 = vunpack.c.l.b16 %v62
    %v202 = vunpack.c.l.b16 %v63
    %v203 = vunpack.c.l.b16 %v64
    %v204 = vunpack.c.l.b16 %v65
    %v205 = vunpack.c.l.b16 %v66
    %v206 = vunpack.c.l.b16 %v67
    %v207 = vunpack.c.l.b16 %v68
    %v208 = vunpack.c.l.b16 %v69
    %v209 = vunpack.c.l.b16 %v70
    %v210 = vunpack.c.l.b16 %v71
    %v211 = vunpack.c.l.b16 %v72
    %v212 = vunpack.c.l.b16 %v73
    %v213 = vunpack.c.l.b16 %v74
    %v214 = vunpack.c.l.b16 %v75
    %v215 = vunpack.c.l.b16 %v76
    %v216 = vunpack.c.l.b16 %v77
    %v217 = vunpack.c.l.b16 %v78
    %v218 = vunpack.c.l.b16 %v79
    %v219 = vunpack.c.l.b16 %v80
    %v220 = vunpack.c.l.b16 %v81
    %v221 = vunpack.c.l.b16 %v82
    %v222 = vunpack.c.l.b16 %v83
    %v223 = vunpack.c.l.b16 %v84
    %v224 = vunpack.c.l.b16 %v85
    %v225 = vunpack.c.l.b16 %v86
    %v226 = vunpack.c.l.b16 %v87
    %v227 = vunpack.c.l.b16 %v88
    %v228 = vunpack.c.l.b16 %v89
    %v229 = vunpack.c.l.b16 %v90
    %v230 = vunpack.c.l.b16 %v91
    %v231 = vunpack.c.l.b16 %v92
    %v232 = vpack.c.b16 %v169, %v168
    %v233 = vpack.c.b16 %v171, %v170
    %v234 = vpack.c.b16 %v173, %v172
    %v235 = vpack.c.b16 %v175, %v174
    %v236 = vpack.c.b16 %v177, %v176
    %v237 = vpack.c.b16 %v179, %v178
    %v238 = vpack.c.b16 %v181, %v180
    %v239 = vpack.c.b16 %v183, %v182
    %v240 = vpack.c.b16 %v185, %v184
    %v241 = vpack.c.b16 %v187, %v186
    %v242 = vpack.c.b16 %v189, %v188
    %v243 = vpack.c.b16 %v191, %v190
    %v244 = vpack.c.b16 %v193, %v192
    %v245 = vpack.c.b16 %v195, %v194
    %v246 = vpack.c.b16 %v197, %v196
    %v247 = vpack.c.b16 %v199, %v198
    %v248 = vpack.c.b16 %v201, %v200
    %v249 = vpack.c.b16 %v203, %v202
    %v250 = vpack.c.b16 %v205, %v204
    %v251 = vpack.c.b16 %v207, %v206
    %v252 = vpack.c.b16 %v209, %v208
    %v253 = vpack.c.b16 %v211, %v210
    %v254 = vpack.c.b16 %v213, %v212
    %v255 = vpack.c.b16 %v215, %v214
    %v256 = vpack.c.b16 %v217, %v216
    %v257 = vpack.c.b16 %v219, %v218
    %v258 = vpack.c.b16 %v221, %v220
    %v259 = vpack.c.b16 %v223, %v222
    %v260 = vpack.c.b16 %v225, %v224
    %v261 = vpack.c.b16 %v227, %v226
    %v262 = vpack.c.b16 %v229, %v228
    %v263 = vpack.c.b16 %v231, %v230
    %v268 = vunpack.c.l.b16 %v93
    %v269 = vunpack.c.l.b16 %v94
    %v270 = vunpack.c.l.b16 %v95
    %v271 = vunpack.c.l.b16 %v96
    %v272 = vpack.c.b16 %v269, %v268
    %v273 = vpack.c.b16 %v271, %v270
    %vm275 = vcmask 220160
    %v277 = vsel %vm275, %v232, 0
    %v280 = vsel %vm275, %v233, 0
    %v283 = vsel %vm275, %v234, 0
    %v286 = vsel %vm275, %v235, 0
    %v289 = vsel %vm275, %v236, 0
    %v292 = vsel %vm275, %v237, 0
    %v295 = vsel %vm275, %v238, 0
    %v298 = vsel %vm275, %v239, 0
    %v301 = vsel %vm275, %v240, 0
    %v304 = vsel %vm275, %v241, 0
    %v307 = vsel %vm275, %v242, 0
    %v310 = vsel %vm275, %v243, 0
    %v313 = vsel %vm275, %v244, 0
    %v316 = vsel %vm275, %v245, 0
    %v319 = vsel %vm275, %v246, 0
    %v322 = vsel %vm275, %v247, 0
    %v325 = vsel %vm275, %v248, 0
    %v328 = vsel %vm275, %v249, 0
    %v331 = vsel %vm275, %v250, 0
    %v334 = vsel %vm275, %v251, 0
    %v337 = vsel %vm275, %v252, 0
    %v340 = vsel %vm275, %v253, 0
    %v343 = vsel %vm275, %v254, 0
    %v346 = vsel %vm275, %v255, 0
    %v349 = vsel %vm275, %v256, 0
    %v352 = vsel %vm275, %v257, 0
    %v355 = vsel %vm275, %v258, 0
    %v358 = vsel %vm275, %v259, 0
    %v361 = vsel %vm275, %v260, 0
    %v364 = vsel %vm275, %v261, 0
    %v367 = vsel %vm275, %v262, 0
    %v370 = vsel %vm275, %v263, 0
    %vm372 = vcmask 1044480
    %vm373 = vcmask 1045504
    %v374 = vsel %vm372, 4294967295, 65535
    %v375 = vsel %vm373, %v374, 0
    %v377 = vand.u32 %v273, %v375
    %379 = vmatprep.subr.bf16.mxu0 0
    %380 = vmatpush1.bf16.msra.mxu0 0
    %381 = vmatprep.subr.bf16.mxu0 0
    %382 = vmatpush1.bf16.msra.mxu0 0
    %383 = vmatprep.subr.bf16.mxu0 0
    %384 = vmatpush1.bf16.msra.mxu0 0
    %385 = vmatprep.subr.bf16.mxu0 0
    %386 = vmatpush1.bf16.msra.mxu0 0
    %387 = vmatprep.subr.bf16.mxu0 0
    %388 = vmatpush1.bf16.msra.mxu0 0
    %389 = vmatprep.subr.bf16.mxu0 0
    %390 = vmatpush1.bf16.msra.mxu0 0
    %391 = vmatprep.subr.bf16.mxu0 0
    %392 = vmatpush1.bf16.msra.mxu0 %v377
    %393 = vmatprep.subr.bf16.mxu0 0
    %394 = vmatpush1.bf16.msra.mxu0 %v272
    %395 = vmatprep.subr.bf16.mxu0 0
    %396 = vmatpush2.bf16.msra.mxu0 0
    %397 = vmatprep.subr.bf16.mxu0 0
    %398 = vmatpush2.bf16.msra.mxu0 0
    %399 = vmatprep.subr.bf16.mxu0 0
    %400 = vmatpush2.bf16.msra.mxu0 0
    %401 = vmatprep.subr.bf16.mxu0 0
    %402 = vmatpush2.bf16.msra.mxu0 0
    %403 = vmatprep.subr.bf16.mxu0 0
    %404 = vmatpush2.bf16.msra.mxu0 0
    %405 = vmatprep.subr.bf16.mxu0 0
    %406 = vmatpush2.bf16.msra.mxu0 0
    %407 = vmatprep.subr.bf16.mxu0 0
    %408 = vmatpush2.bf16.msra.mxu0 0
    %409 = vmatprep.subr.bf16.mxu0 0
    %410 = vmatpush2.bf16.msra.mxu0 0
    %411 = vmatprep.mubr.bf16.mxu0 0
    %412 = vmatmul.mubr.bf16.gmra.mxu0 %v277
    %v413 = vpop.f32.mrf.mxu0
    %v414 = vadd.f32 %v102, %v413
    %v415 = vpop.f32.mrf.mxu0
    %v416 = vpop.f32.mrf.mxu0
    %v417 = vadd.f32 %v102, %v416
    %v418 = vpop.f32.mrf.mxu0
    %419 = vmatprep.mubr.bf16.mxu0 0
    %420 = vmatmul.mubr.bf16.gmra.mxu0 %v280
    %v421 = vpop.f32.mrf.mxu0
    %v422 = vadd.f32 %v102, %v421
    %v423 = vpop.f32.mrf.mxu0
    %v424 = vpop.f32.mrf.mxu0
    %v425 = vadd.f32 %v102, %v424
    %v426 = vpop.f32.mrf.mxu0
    %427 = vmatprep.mubr.bf16.mxu0 0
    %428 = vmatmul.mubr.bf16.gmra.mxu0 %v283
    %v429 = vpop.f32.mrf.mxu0
    %v430 = vadd.f32 %v102, %v429
    %v431 = vpop.f32.mrf.mxu0
    %v432 = vpop.f32.mrf.mxu0
    %v433 = vadd.f32 %v102, %v432
    %v434 = vpop.f32.mrf.mxu0
    %435 = vmatprep.mubr.bf16.mxu0 0
    %436 = vmatmul.mubr.bf16.gmra.mxu0 %v286
    %v437 = vpop.f32.mrf.mxu0
    %v438 = vadd.f32 %v102, %v437
    %v439 = vpop.f32.mrf.mxu0
    %v440 = vpop.f32.mrf.mxu0
    %v441 = vadd.f32 %v102, %v440
    %v442 = vpop.f32.mrf.mxu0
    %443 = vmatprep.mubr.bf16.mxu0 0
    %444 = vmatmul.mubr.bf16.gmra.mxu0 %v289
    %v445 = vpop.f32.mrf.mxu0
    %v446 = vadd.f32 %v102, %v445
    %v447 = vpop.f32.mrf.mxu0
    %v448 = vpop.f32.mrf.mxu0
    %v449 = vadd.f32 %v102, %v448
    %v450 = vpop.f32.mrf.mxu0
    %451 = vmatprep.mubr.bf16.mxu0 0
    %452 = vmatmul.mubr.bf16.gmra.mxu0 %v292
    %v453 = vpop.f32.mrf.mxu0
    %v454 = vadd.f32 %v102, %v453
    %v455 = vpop.f32.mrf.mxu0
    %v456 = vpop.f32.mrf.mxu0
    %v457 = vadd.f32 %v102, %v456
    %v458 = vpop.f32.mrf.mxu0
    %459 = vmatprep.mubr.bf16.mxu0 0
    %460 = vmatmul.mubr.bf16.gmra.mxu0 %v295
    %v461 = vpop.f32.mrf.mxu0
    %v462 = vadd.f32 %v102, %v461
    %v463 = vpop.f32.mrf.mxu0
    %v464 = vpop.f32.mrf.mxu0
    %v465 = vadd.f32 %v102, %v464
    %v466 = vpop.f32.mrf.mxu0
    %467 = vmatprep.mubr.bf16.mxu0 0
    %468 = vmatmul.mubr.bf16.gmra.mxu0 %v298
    %v469 = vpop.f32.mrf.mxu0
    %v470 = vadd.f32 %v102, %v469
    %v471 = vpop.f32.mrf.mxu0
    %v472 = vpop.f32.mrf.mxu0
    %v473 = vadd.f32 %v102, %v472
    %v474 = vpop.f32.mrf.mxu0
    %475 = vmatprep.mubr.bf16.mxu0 0
    %476 = vmatmul.mubr.bf16.gmra.mxu0 %v301
    %v477 = vpop.f32.mrf.mxu0
    %v478 = vadd.f32 %v102, %v477
    %v479 = vpop.f32.mrf.mxu0
    %v480 = vpop.f32.mrf.mxu0
    %v481 = vadd.f32 %v102, %v480
    %v482 = vpop.f32.mrf.mxu0
    %483 = vmatprep.mubr.bf16.mxu0 0
    %484 = vmatmul.mubr.bf16.gmra.mxu0 %v304
    %v485 = vpop.f32.mrf.mxu0
    %v486 = vadd.f32 %v102, %v485
    %v487 = vpop.f32.mrf.mxu0
    %v488 = vpop.f32.mrf.mxu0
    %v489 = vadd.f32 %v102, %v488
    %v490 = vpop.f32.mrf.mxu0
    %491 = vmatprep.mubr.bf16.mxu0 0
    %492 = vmatmul.mubr.bf16.gmra.mxu0 %v307
    %v493 = vpop.f32.mrf.mxu0
    %v494 = vadd.f32 %v102, %v493
    %v495 = vpop.f32.mrf.mxu0
    %v496 = vpop.f32.mrf.mxu0
    %v497 = vadd.f32 %v102, %v496
    %v498 = vpop.f32.mrf.mxu0
    %499 = vmatprep.mubr.bf16.mxu0 0
    %500 = vmatmul.mubr.bf16.gmra.mxu0 %v310
    %v501 = vpop.f32.mrf.mxu0
    %v502 = vadd.f32 %v102, %v501
    %v503 = vpop.f32.mrf.mxu0
    %v504 = vpop.f32.mrf.mxu0
    %v505 = vadd.f32 %v102, %v504
    %v506 = vpop.f32.mrf.mxu0
    %507 = vmatprep.mubr.bf16.mxu0 0
    %508 = vmatmul.mubr.bf16.gmra.mxu0 %v313
    %v509 = vpop.f32.mrf.mxu0
    %v510 = vadd.f32 %v102, %v509
    %v511 = vpop.f32.mrf.mxu0
    %v512 = vpop.f32.mrf.mxu0
    %v513 = vadd.f32 %v102, %v512
    %v514 = vpop.f32.mrf.mxu0
    %515 = vmatprep.mubr.bf16.mxu0 0
    %516 = vmatmul.mubr.bf16.gmra.mxu0 %v316
    %v517 = vpop.f32.mrf.mxu0
    %v518 = vadd.f32 %v102, %v517
    %v519 = vpop.f32.mrf.mxu0
    %v520 = vpop.f32.mrf.mxu0
    %v521 = vadd.f32 %v102, %v520
    %v522 = vpop.f32.mrf.mxu0
    %523 = vmatprep.mubr.bf16.mxu0 0
    %524 = vmatmul.mubr.bf16.gmra.mxu0 %v319
    %v525 = vpop.f32.mrf.mxu0
    %v526 = vadd.f32 %v102, %v525
    %v527 = vpop.f32.mrf.mxu0
    %v528 = vpop.f32.mrf.mxu0
    %v529 = vadd.f32 %v102, %v528
    %v530 = vpop.f32.mrf.mxu0
    %531 = vmatprep.mubr.bf16.mxu0 0
    %532 = vmatmul.mubr.bf16.gmra.mxu0 %v322
    %v533 = vpop.f32.mrf.mxu0
    %v534 = vadd.f32 %v102, %v533
    %v535 = vpop.f32.mrf.mxu0
    %v536 = vpop.f32.mrf.mxu0
    %v537 = vadd.f32 %v102, %v536
    %v538 = vpop.f32.mrf.mxu0
    %539 = vmatprep.mubr.bf16.mxu0 0
    %540 = vmatmul.mubr.bf16.gmra.mxu0 %v325
    %v541 = vpop.f32.mrf.mxu0
    %v542 = vadd.f32 %v102, %v541
    %v543 = vpop.f32.mrf.mxu0
    %v544 = vpop.f32.mrf.mxu0
    %v545 = vadd.f32 %v102, %v544
    %v546 = vpop.f32.mrf.mxu0
    %547 = vmatprep.mubr.bf16.mxu0 0
    %548 = vmatmul.mubr.bf16.gmra.mxu0 %v328
    %v549 = vpop.f32.mrf.mxu0
    %v550 = vadd.f32 %v102, %v549
    %v551 = vpop.f32.mrf.mxu0
    %v552 = vpop.f32.mrf.mxu0
    %v553 = vadd.f32 %v102, %v552
    %v554 = vpop.f32.mrf.mxu0
    %555 = vmatprep.mubr.bf16.mxu0 0
    %556 = vmatmul.mubr.bf16.gmra.mxu0 %v331
    %v557 = vpop.f32.mrf.mxu0
    %v558 = vadd.f32 %v102, %v557
    %v559 = vpop.f32.mrf.mxu0
    %v560 = vpop.f32.mrf.mxu0
    %v561 = vadd.f32 %v102, %v560
    %v562 = vpop.f32.mrf.mxu0
    %563 = vmatprep.mubr.bf16.mxu0 0
    %564 = vmatmul.mubr.bf16.gmra.mxu0 %v334
    %v565 = vpop.f32.mrf.mxu0
    %v566 = vadd.f32 %v102, %v565
    %v567 = vpop.f32.mrf.mxu0
    %v568 = vpop.f32.mrf.mxu0
    %v569 = vadd.f32 %v102, %v568
    %v570 = vpop.f32.mrf.mxu0
    %571 = vmatprep.mubr.bf16.mxu0 0
    %572 = vmatmul.mubr.bf16.gmra.mxu0 %v337
    %v573 = vpop.f32.mrf.mxu0
    %v574 = vadd.f32 %v102, %v573
    %v575 = vpop.f32.mrf.mxu0
    %v576 = vpop.f32.mrf.mxu0
    %v577 = vadd.f32 %v102, %v576
    %v578 = vpop.f32.mrf.mxu0
    %579 = vmatprep.mubr.bf16.mxu0 0
    %580 = vmatmul.mubr.bf16.gmra.mxu0 %v340
    %v581 = vpop.f32.mrf.mxu0
    %v582 = vadd.f32 %v102, %v581
    %v583 = vpop.f32.mrf.mxu0
    %v584 = vpop.f32.mrf.mxu0
    %v585 = vadd.f32 %v102, %v584
    %v586 = vpop.f32.mrf.mxu0
    %587 = vmatprep.mubr.bf16.mxu0 0
    %588 = vmatmul.mubr.bf16.gmra.mxu0 %v343
    %v589 = vpop.f32.mrf.mxu0
    %v590 = vadd.f32 %v102, %v589
    %v591 = vpop.f32.mrf.mxu0
    %v592 = vpop.f32.mrf.mxu0
    %v593 = vadd.f32 %v102, %v592
    %v594 = vpop.f32.mrf.mxu0
    %595 = vmatprep.mubr.bf16.mxu0 0
    %596 = vmatmul.mubr.bf16.gmra.mxu0 %v346
    %v597 = vpop.f32.mrf.mxu0
    %v598 = vadd.f32 %v102, %v597
    %v599 = vpop.f32.mrf.mxu0
    %v600 = vpop.f32.mrf.mxu0
    %v601 = vadd.f32 %v102, %v600
    %v602 = vpop.f32.mrf.mxu0
    %603 = vmatprep.mubr.bf16.mxu0 0
    %604 = vmatmul.mubr.bf16.gmra.mxu0 %v349
    %v605 = vpop.f32.mrf.mxu0
    %v606 = vadd.f32 %v102, %v605
    %v607 = vpop.f32.mrf.mxu0
    %v608 = vpop.f32.mrf.mxu0
    %v609 = vadd.f32 %v102, %v608
    %v610 = vpop.f32.mrf.mxu0
    %611 = vmatprep.mubr.bf16.mxu0 0
    %612 = vmatmul.mubr.bf16.gmra.mxu0 %v352
    %v613 = vpop.f32.mrf.mxu0
    %v614 = vadd.f32 %v102, %v613
    %v615 = vpop.f32.mrf.mxu0
    %v616 = vpop.f32.mrf.mxu0
    %v617 = vadd.f32 %v102, %v616
    %v618 = vpop.f32.mrf.mxu0
    %619 = vmatprep.mubr.bf16.mxu0 0
    %620 = vmatmul.mubr.bf16.gmra.mxu0 %v355
    %v621 = vpop.f32.mrf.mxu0
    %v622 = vadd.f32 %v102, %v621
    %v623 = vpop.f32.mrf.mxu0
    %v624 = vpop.f32.mrf.mxu0
    %v625 = vadd.f32 %v102, %v624
    %v626 = vpop.f32.mrf.mxu0
    %627 = vmatprep.mubr.bf16.mxu0 0
    %628 = vmatmul.mubr.bf16.gmra.mxu0 %v358
    %v629 = vpop.f32.mrf.mxu0
    %v630 = vadd.f32 %v102, %v629
    %v631 = vpop.f32.mrf.mxu0
    %v632 = vpop.f32.mrf.mxu0
    %v633 = vadd.f32 %v102, %v632
    %v634 = vpop.f32.mrf.mxu0
    %635 = vmatprep.mubr.bf16.mxu0 0
    %636 = vmatmul.mubr.bf16.gmra.mxu0 %v361
    %v637 = vpop.f32.mrf.mxu0
    %v638 = vadd.f32 %v102, %v637
    %v639 = vpop.f32.mrf.mxu0
    %v640 = vpop.f32.mrf.mxu0
    %v641 = vadd.f32 %v102, %v640
    %v642 = vpop.f32.mrf.mxu0
    %643 = vmatprep.mubr.bf16.mxu0 0
    %644 = vmatmul.mubr.bf16.gmra.mxu0 %v364
    %v645 = vpop.f32.mrf.mxu0
    %v646 = vadd.f32 %v102, %v645
    %v647 = vpop.f32.mrf.mxu0
    %v648 = vpop.f32.mrf.mxu0
    %v649 = vadd.f32 %v102, %v648
    %v650 = vpop.f32.mrf.mxu0
    %651 = vmatprep.mubr.bf16.mxu0 0
    %652 = vmatmul.mubr.bf16.gmra.mxu0 %v367
    %v653 = vpop.f32.mrf.mxu0
    %v654 = vadd.f32 %v102, %v653
    %v655 = vpop.f32.mrf.mxu0
    %v656 = vpop.f32.mrf.mxu0
    %v657 = vadd.f32 %v102, %v656
    %v658 = vpop.f32.mrf.mxu0
    %659 = vmatprep.mubr.bf16.mxu0 0
    %660 = vmatmul.mubr.bf16.gmra.mxu0 %v370
    %v661 = vpop.f32.mrf.mxu0
    %v662 = vadd.f32 %v102, %v661
    %v663 = vpop.f32.mrf.mxu0
    %v664 = vpop.f32.mrf.mxu0
    %v665 = vadd.f32 %v102, %v664
    %v666 = vpop.f32.mrf.mxu0
    %667 = vdwg.mxu0
    %v668 = vmax.f32 %v414, 0.0
    %v669 = vmax.f32 %v417, 0.0
    %v670 = vmax.f32 %v422, 0.0
    %v671 = vmax.f32 %v425, 0.0
    %v672 = vmax.f32 %v430, 0.0
    %v673 = vmax.f32 %v433, 0.0
    %v674 = vmax.f32 %v438, 0.0
    %v675 = vmax.f32 %v441, 0.0
    %v676 = vmax.f32 %v446, 0.0
    %v677 = vmax.f32 %v449, 0.0
    %v678 = vmax.f32 %v454, 0.0
    %v679 = vmax.f32 %v457, 0.0
    %v680 = vmax.f32 %v462, 0.0
    %v681 = vmax.f32 %v465, 0.0
    %v682 = vmax.f32 %v470, 0.0
    %v683 = vmax.f32 %v473, 0.0
    %v684 = vmax.f32 %v478, 0.0
    %v685 = vmax.f32 %v481, 0.0
    %v686 = vmax.f32 %v486, 0.0
    %v687 = vmax.f32 %v489, 0.0
    %v688 = vmax.f32 %v494, 0.0
    %v689 = vmax.f32 %v497, 0.0
    %v690 = vmax.f32 %v502, 0.0
    %v691 = vmax.f32 %v505, 0.0
    %v692 = vmax.f32 %v510, 0.0
    %v693 = vmax.f32 %v513, 0.0
    %v694 = vmax.f32 %v518, 0.0
    %v695 = vmax.f32 %v521, 0.0
    %v696 = vmax.f32 %v526, 0.0
    %v697 = vmax.f32 %v529, 0.0
    %v698 = vmax.f32 %v534, 0.0
    %v699 = vmax.f32 %v537, 0.0
    %v700 = vmax.f32 %v542, 0.0
    %v701 = vmax.f32 %v545, 0.0
    %v702 = vmax.f32 %v550, 0.0
    %v703 = vmax.f32 %v553, 0.0
    %v704 = vmax.f32 %v558, 0.0
    %v705 = vmax.f32 %v561, 0.0
    %v706 = vmax.f32 %v566, 0.0
    %v707 = vmax.f32 %v569, 0.0
    %v708 = vmax.f32 %v574, 0.0
    %v709 = vmax.f32 %v577, 0.0
    %v710 = vmax.f32 %v582, 0.0
    %v711 = vmax.f32 %v585, 0.0
    %v712 = vmax.f32 %v590, 0.0
    %v713 = vmax.f32 %v593, 0.0
    %v714 = vmax.f32 %v598, 0.0
    %v715 = vmax.f32 %v601, 0.0
    %v716 = vmax.f32 %v606, 0.0
    %v717 = vmax.f32 %v609, 0.0
    %v718 = vmax.f32 %v614, 0.0
    %v719 = vmax.f32 %v617, 0.0
    %v720 = vmax.f32 %v622, 0.0
    %v721 = vmax.f32 %v625, 0.0
    %v722 = vmax.f32 %v630, 0.0
    %v723 = vmax.f32 %v633, 0.0
    %v724 = vmax.f32 %v638, 0.0
    %v725 = vmax.f32 %v641, 0.0
    %v726 = vmax.f32 %v646, 0.0
    %v727 = vmax.f32 %v649, 0.0
    %v728 = vmax.f32 %v654, 0.0
    %v729 = vmax.f32 %v657, 0.0
    %v730 = vmax.f32 %v662, 0.0
    %v731 = vmax.f32 %v665, 0.0
    %v732 = vld [vmem:[#allocation2] sm:$0x3]
    %v733 = vadd.f32 %v668, %v669
    %v734 = vadd.f32 %v733, %v670
    %v735 = vadd.f32 %v734, %v671
    %v736 = vadd.f32 %v735, %v672
    %v737 = vadd.f32 %v736, %v673
    %v738 = vadd.f32 %v737, %v674
    %v739 = vadd.f32 %v738, %v675
    %v740 = vadd.f32 %v739, %v676
    %v741 = vadd.f32 %v740, %v677
    %v742 = vadd.f32 %v741, %v678
    %v743 = vadd.f32 %v742, %v679
    %v744 = vadd.f32 %v743, %v680
    %v745 = vadd.f32 %v744, %v681
    %v746 = vadd.f32 %v745, %v682
    %v747 = vadd.f32 %v746, %v683
    %v748 = vadd.f32 %v747, %v684
    %v749 = vadd.f32 %v748, %v685
    %v750 = vadd.f32 %v749, %v686
    %v751 = vadd.f32 %v750, %v687
    %v752 = vadd.f32 %v751, %v688
    %v753 = vadd.f32 %v752, %v689
    %v754 = vadd.f32 %v753, %v690
    %v755 = vadd.f32 %v754, %v691
    %v756 = vadd.f32 %v755, %v692
    %v757 = vadd.f32 %v756, %v693
    %v758 = vadd.f32 %v757, %v694
    %v759 = vadd.f32 %v758, %v695
    %v760 = vadd.f32 %v759, %v696
    %v761 = vadd.f32 %v760, %v697
    %v762 = vadd.f32 %v761, %v698
    %v763 = vadd.f32 %v762, %v699
    %v764 = vrot.slane %v763, 4
    %v765 = vadd.f32 %v763, %v764
    %v766 = vrot.slane %v765, 2
    %v767 = vadd.f32 %v765, %v766
    %v768 = vrot.slane %v767, 1
    %v769 = vadd.f32 %v767, %v768
    %v770 = vadd.f32 %v700, %v701
    %v771 = vadd.f32 %v770, %v702
    %v772 = vadd.f32 %v771, %v703
    %v773 = vadd.f32 %v772, %v704
    %v774 = vadd.f32 %v773, %v705
    %v775 = vadd.f32 %v774, %v706
    %v776 = vadd.f32 %v775, %v707
    %v777 = vadd.f32 %v776, %v708
    %v778 = vadd.f32 %v777, %v709
    %v779 = vadd.f32 %v778, %v710
    %v780 = vadd.f32 %v779, %v711
    %v781 = vadd.f32 %v780, %v712
    %v782 = vadd.f32 %v781, %v713
    %v783 = vadd.f32 %v782, %v714
    %v784 = vadd.f32 %v783, %v715
    %v785 = vadd.f32 %v784, %v716
    %v786 = vadd.f32 %v785, %v717
    %v787 = vadd.f32 %v786, %v718
    %v788 = vadd.f32 %v787, %v719
    %v789 = vadd.f32 %v788, %v720
    %v790 = vadd.f32 %v789, %v721
    %v791 = vadd.f32 %v790, %v722
    %v792 = vadd.f32 %v791, %v723
    %v793 = vadd.f32 %v792, %v724
    %v794 = vadd.f32 %v793, %v725
    %v795 = vadd.f32 %v794, %v726
    %v796 = vadd.f32 %v795, %v727
    %v797 = vadd.f32 %v796, %v728
    %v798 = vadd.f32 %v797, %v729
    %v799 = vadd.f32 %v798, %v730
    %v800 = vadd.f32 %v799, %v731
    %v801 = vrot.slane %v800, 4
    %v802 = vadd.f32 %v800, %v801
    %v803 = vrot.slane %v802, 2
    %v804 = vadd.f32 %v802, %v803
    %v805 = vrot.slane %v804, 1
    %v806 = vadd.f32 %v804, %v805
    %vm809 = vcmask 1041409
    %v810 = vsel %vm809, %v806, %v769
    %v812 = vadd.f32 %v732, %v810
    %813 = vst [vmem:[#allocation2] sm:$0x3] %v812
    // Predicated region
    $region26: #{foster_net_forward.1} parent=1 // pred_check
      %p814 = pneg %p24
    $region27: #{foster_net_forward.1} parent=1 // pred_check_branch
      %816 = sbr.rel (%p814) target = $region29
    $region28: #{foster_net_forward.1} parent=1 // pred_region
      %v817 = vld [vmem:[#allocation2] sm:$0x3]
      %v818 = vmul.f32 %v817, 0.00390625
      %819 = vst [vmem:[#allocation2] sm:$0x3] %v818
      %v820 = vpack.c.bf16 %v818, %v818
      %v821 = vld [vmem:[%s3] sm:$0xff]
      %v822 = vld [vmem:[%s3 + $0x8] sm:$0xf]
      %v823 = vld [vmem:[%s3 + $0xc] sm:$0xff]
      %v824 = vld [vmem:[%s3 + $0x14] sm:$0xf]
      %v825 = vld [vmem:[%s3 + $0x18] sm:$0xff]
      %v826 = vld [vmem:[%s3 + $0x20] sm:$0xf]
      %v827 = vld [vmem:[%s3 + $0x24] sm:$0xff]
      %v828 = vld [vmem:[%s3 + $0x2c] sm:$0xf]
      %v829 = vld [vmem:[%s3 + $0x30] sm:$0xff]
      %v830 = vld [vmem:[%s3 + $0x38] sm:$0xf]
      %v831 = vld [vmem:[%s3 + $0x3c] sm:$0xff]
      %v832 = vld [vmem:[%s3 + $0x44] sm:$0xf]
      %v833 = vld [vmem:[%s3 + $0x48] sm:$0xff]
      %v834 = vld [vmem:[%s3 + $0x50] sm:$0xf]
      %v835 = vld [vmem:[%s3 + $0x54] sm:$0xff]
      %v836 = vld [vmem:[%s3 + $0x5c] sm:$0xf]
      %v837 = vld [vmem:[%s3 + $0x60] sm:$0xff]
      %v838 = vld [vmem:[%s3 + $0x68] sm:$0xf]
      %v839 = vld [vmem:[%s3 + $0x6c] sm:$0xff]
      %v840 = vld [vmem:[%s3 + $0x74] sm:$0xf]
      %v841 = vld [vmem:[%s3 + $0x78] sm:$0xff]
      %v842 = vld [vmem:[%s3 + $0x80] sm:$0xf]
      %v843 = vld [vmem:[%s3 + $0x84] sm:$0xff]
      %v844 = vld [vmem:[%s3 + $0x8c] sm:$0xf]
      %v845 = vld [vmem:[%s3 + $0x90] sm:$0xff]
      %v846 = vld [vmem:[%s3 + $0x98] sm:$0xf]
      %v847 = vld [vmem:[%s3 + $0x9c] sm:$0xff]
      %v848 = vld [vmem:[%s3 + $0xa4] sm:$0xf]
      %v849 = vld [vmem:[%s3 + $0xa8] sm:$0xff]
      %v850 = vld [vmem:[%s3 + $0xb0] sm:$0xf]
      %v851 = vld [vmem:[%s3 + $0xb4] sm:$0xff]
      %v852 = vld [vmem:[%s3 + $0xbc] sm:$0xf]
      %v853 = vld [vmem:[%s4] sm:$0x7]
      %v855 = vlaneseq
      %v856 = vshrl.u32 %v855, 7
      %v857 = vsub.s32 0, %v856
      %v858 = vrot.slane %v853, %v857
      %v859 = vlaneseq
      %v860 = vshrl.u32 %v859, 7
      %v861 = vsub.s32 1, %v860
      %v862 = vrot.slane %v853, %v861
      %v863 = vlaneseq
      %v864 = vshrl.u32 %v863, 7
      %v865 = vsub.s32 2, %v864
      %v866 = vrot.slane %v853, %v865
      %v902 = vunpack.c.l.b16 %v821
      %v903 = vunpack.c.h.b16 %v821
      %v904 = vunpack.c.l.b16 %v822
      %v905 = vunpack.c.l.b16 %v823
      %v906 = vunpack.c.h.b16 %v823
      %v907 = vunpack.c.l.b16 %v824
      %v908 = vunpack.c.l.b16 %v825
      %v909 = vunpack.c.h.b16 %v825
      %v910 = vunpack.c.l.b16 %v826
      %v911 = vunpack.c.l.b16 %v827
      %v912 = vunpack.c.h.b16 %v827
      %v913 = vunpack.c.l.b16 %v828
      %v914 = vunpack.c.l.b16 %v829
      %v915 = vunpack.c.h.b16 %v829
      %v916 = vunpack.c.l.b16 %v830
      %v917 = vunpack.c.l.b16 %v831
      %v918 = vunpack.c.h.b16 %v831
      %v919 = vunpack.c.l.b16 %v832
      %v920 = vunpack.c.l.b16 %v833
      %v921 = vunpack.c.h.b16 %v833
      %v922 = vunpack.c.l.b16 %v834
      %v923 = vunpack.c.l.b16 %v835
      %v924 = vunpack.c.h.b16 %v835
      %v925 = vunpack.c.l.b16 %v836
      %v926 = vunpack.c.l.b16 %v837
      %v927 = vunpack.c.h.b16 %v837
      %v928 = vunpack.c.l.b16 %v838
      %v929 = vunpack.c.l.b16 %v839
      %v930 = vunpack.c.h.b16 %v839
      %v931 = vunpack.c.l.b16 %v840
      %v932 = vunpack.c.l.b16 %v841
      %v933 = vunpack.c.h.b16 %v841
      %v934 = vunpack.c.l.b16 %v842
      %v935 = vunpack.c.l.b16 %v843
      %v936 = vunpack.c.h.b16 %v843
      %v937 = vunpack.c.l.b16 %v844
      %v938 = vunpack.c.l.b16 %v845
      %v939 = vunpack.c.h.b16 %v845
      %v940 = vunpack.c.l.b16 %v846
      %v941 = vunpack.c.l.b16 %v847
      %v942 = vunpack.c.h.b16 %v847
      %v943 = vunpack.c.l.b16 %v848
      %v944 = vunpack.c.l.b16 %v849
      %v945 = vunpack.c.h.b16 %v849
      %v946 = vunpack.c.l.b16 %v850
      %v947 = vunpack.c.l.b16 %v851
      %v948 = vunpack.c.h.b16 %v851
      %v949 = vunpack.c.l.b16 %v852
      %v950 = vpack.c.b16 %v905, %v902
      %v951 = vpack.c.b16 %v906, %v903
      %v952 = vpack.c.b16 %v907, %v904
      %v953 = vpack.c.b16 %v911, %v908
      %v954 = vpack.c.b16 %v912, %v909
      %v955 = vpack.c.b16 %v913, %v910
      %v956 = vpack.c.b16 %v917, %v914
      %v957 = vpack.c.b16 %v918, %v915
      %v958 = vpack.c.b16 %v919, %v916
      %v959 = vpack.c.b16 %v923, %v920
      %v960 = vpack.c.b16 %v924, %v921
      %v961 = vpack.c.b16 %v925, %v922
      %v962 = vpack.c.b16 %v929, %v926
      %v963 = vpack.c.b16 %v930, %v927
      %v964 = vpack.c.b16 %v931, %v928
      %v965 = vpack.c.b16 %v935, %v932
      %v966 = vpack.c.b16 %v936, %v933
      %v967 = vpack.c.b16 %v937, %v934
      %v968 = vpack.c.b16 %v941, %v938
      %v969 = vpack.c.b16 %v942, %v939
      %v970 = vpack.c.b16 %v943, %v940
      %v971 = vpack.c.b16 %v947, %v944
      %v972 = vpack.c.b16 %v948, %v945
      %v973 = vpack.c.b16 %v949, %v946
      %998 = vmatprep.subr.bf16.mxu0 %v972
      %999 = vmatpush1.bf16.msra.mxu0 %v971
      %1000 = vmatprep.subr.bf16.mxu0 %v969
      %1001 = vmatpush1.bf16.msra.mxu0 %v968
      %1002 = vmatprep.subr.bf16.mxu0 %v966
      %1003 = vmatpush1.bf16.msra.mxu0 %v965
      %1004 = vmatprep.subr.bf16.mxu0 %v963
      %1005 = vmatpush1.bf16.msra.mxu0 %v962
      %1006 = vmatprep.subr.bf16.mxu0 %v960
      %1007 = vmatpush1.bf16.msra.mxu0 %v959
      %1008 = vmatprep.subr.bf16.mxu0 %v957
      %1009 = vmatpush1.bf16.msra.mxu0 %v956
      %1010 = vmatprep.subr.bf16.mxu0 %v954
      %1011 = vmatpush1.bf16.msra.mxu0 %v953
      %1012 = vmatprep.subr.bf16.mxu0 %v951
      %1013 = vmatpush1.bf16.msra.mxu0 %v950
      %1014 = vmatprep.subr.bf16.mxu0 0
      %1015 = vmatpush2.bf16.msra.mxu0 0
      %1016 = vmatprep.subr.bf16.mxu0 0
      %1017 = vmatpush2.bf16.msra.mxu0 0
      %1018 = vmatprep.subr.bf16.mxu0 0
      %1019 = vmatpush2.bf16.msra.mxu0 0
      %1020 = vmatprep.subr.bf16.mxu0 0
      %1021 = vmatpush2.bf16.msra.mxu0 0
      %1022 = vmatprep.subr.bf16.mxu0 0
      %1023 = vmatpush2.bf16.msra.mxu0 0
      %1024 = vmatprep.subr.bf16.mxu0 0
      %1025 = vmatpush2.bf16.msra.mxu0 0
      %1026 = vmatprep.subr.bf16.mxu0 0
      %1027 = vmatpush2.bf16.msra.mxu0 0
      %1028 = vmatprep.subr.bf16.mxu0 0
      %1029 = vmatpush2.bf16.msra.mxu0 0
      %1030 = vmatprep.mubr.bf16.mxu0 0
      %1031 = vmatmul.mubr.bf16.gmra.mxu0 %v820
      %v1032 = vpop.f32.mrf.mxu0
      %v1033 = vadd.f32 %v858, %v1032
      %v1034 = vpop.f32.mrf.mxu0
      %v1035 = vadd.f32 %v862, %v1034
      %v1036 = vpop.f32.mrf.mxu0
      %v1037 = vpop.f32.mrf.mxu0
      %1038 = vdwg.mxu0
      %1039 = vmatprep.subr.bf16.mxu0 0
      %1040 = vmatpush1.bf16.msra.mxu0 %v973
      %1041 = vmatprep.subr.bf16.mxu0 0
      %1042 = vmatpush1.bf16.msra.mxu0 %v970
      %1043 = vmatprep.subr.bf16.mxu0 0
      %1044 = vmatpush1.bf16.msra.mxu0 %v967
      %1045 = vmatprep.subr.bf16.mxu0 0
      %1046 = vmatpush1.bf16.msra.mxu0 %v964
      %1047 = vmatprep.subr.bf16.mxu0 0
      %1048 = vmatpush1.bf16.msra.mxu0 %v961
      %1049 = vmatprep.subr.bf16.mxu0 0
      %1050 = vmatpush1.bf16.msra.mxu0 %v958
      %1051 = vmatprep.subr.bf16.mxu0 0
      %1052 = vmatpush1.bf16.msra.mxu0 %v955
      %1053 = vmatprep.subr.bf16.mxu0 0
      %1054 = vmatpush1.bf16.msra.mxu0 %v952
      %1055 = vmatprep.subr.bf16.mxu0 0
      %1056 = vmatpush2.bf16.msra.mxu0 0
      %1057 = vmatprep.subr.bf16.mxu0 0
      %1058 = vmatpush2.bf16.msra.mxu0 0
      %1059 = vmatprep.subr.bf16.mxu0 0
      %1060 = vmatpush2.bf16.msra.mxu0 0
      %1061 = vmatprep.subr.bf16.mxu0 0
      %1062 = vmatpush2.bf16.msra.mxu0 0
      %1063 = vmatprep.subr.bf16.mxu0 0
      %1064 = vmatpush2.bf16.msra.mxu0 0
      %1065 = vmatprep.subr.bf16.mxu0 0
      %1066 = vmatpush2.bf16.msra.mxu0 0
      %1067 = vmatprep.subr.bf16.mxu0 0
      %1068 = vmatpush2.bf16.msra.mxu0 0
      %1069 = vmatprep.subr.bf16.mxu0 0
      %1070 = vmatpush2.bf16.msra.mxu0 0
      %1071 = vmatprep.mubr.bf16.mxu0 0
      %1072 = vmatmul.mubr.bf16.gmra.mxu0 %v820
      %v1073 = vpop.f32.mrf.mxu0
      %v1074 = vadd.f32 %v866, %v1073
      %v1075 = vpop.f32.mrf.mxu0
      %v1076 = vpop.f32.mrf.mxu0
      %v1077 = vpop.f32.mrf.mxu0
      %1078 = vdwg.mxu0
      %v1082 = vcombine.low %v1033, %v1035
      %v1084 = vunpack.c.l.s4 1983009808
      %v1085 = vunpack.c.0.s8 %v1084
      %v1086 = vlaneseq
      %v1087 = vshrl.u32 %v1086, 7
      %v1088 = vsub.s32 %v1085, %v1087
      %v1089 = vrot.slane %v1082, %v1088
      %v1091 = vunpack.c.l.s4 1983009808
      %v1092 = vunpack.c.0.s8 %v1091
      %v1093 = vlaneseq
      %v1094 = vshrl.u32 %v1093, 7
      %v1095 = vsub.s32 %v1092, %v1094
      %v1096 = vrot.slane %v1074, %v1095
      %v1097 = vcombine.low %v1089, %v1096
      %1099 = vst [vmem:[%s6] sm:$0x3f] %v1097
    $region29: #{foster_net_forward.1} parent=1 // pred_fallthru
      _
    // Predicated region
    $region30: #{foster_net_forward.1} parent=1 // pred_check
      _
    $region31: #{foster_net_forward.1} parent=1 // pred_check_branch
      %1101 = sbr.rel (0) target = $region33
    $region32: #{foster_net_forward.1} parent=1 // pred_region
      %s1103 = ssub.s32 32, 32
      %1104 = vsyncadd [#allocation3], %s1103
      %s1106 = sshll.u32 [#allocation2], 4
      %s1107 = int_to_ptr.vmem [resolvable:$true] %s1106
      %1109 = dma.vmem_to_hbm [thread:$0]  %s1107, 32, %s5, [#allocation3]
    $region33: #{foster_net_forward.1} parent=1 // pred_fallthru
      _
    // Predicated region
    $region34: #{foster_net_forward.1} parent=1 // pred_check
      _
    $region35: #{foster_net_forward.1} parent=1 // pred_check_branch
      %1111 = sbr.rel (0) target = $region37
    $region36: #{foster_net_forward.1} parent=1 // pred_region
      _
    $region37: #{foster_net_forward.1} parent=1 // pred_fallthru
      _
    // Predicated region
    $region38: #{foster_net_forward.1} parent=1 // pred_check
      _
    $region39: #{foster_net_forward.1} parent=1 // pred_check_branch
      %1113 = sbr.rel (0) target = $region41
    $region40: #{foster_net_forward.1} parent=1 // pred_region
      %1114 = dma.done [#allocation3], 32
    $region41: #{foster_net_forward.1} parent=1 // pred_fallthru
      _
    // Predicated region
    $region42: #{foster_net_forward.1} parent=1 // pred_check
      _
    $region43: #{foster_net_forward.1} parent=1 // pred_check_branch
      %1116 = sbr.rel (0) target = $region45
    $region44: #{foster_net_forward.1} parent=1 // pred_region
      _
    $region45: #{foster_net_forward.1} parent=1 // pred_fallthru
      _
    %1117 = vsyncpa [#allocation3], 1

</llo_original>
